<compile_context>
chip_gen: v7x
topology: tpu7x:2x2x1
jax: 0.10.0
libtpu: 0.0.40
codegen_flags: <defaults>
</compile_context>

<pallas_src>
import jax
import jax.numpy as jnp
from jax.experimental import pallas as pl
from jax.experimental.pallas import tpu as pltpu

EPS = 1e-5


def model_kernel(x_ref, w_ref, b_ref, g_ref, bt_ref, o_ref):
    # x_ref : SMEM (2*N,) f32  -- flattened (N, 2) input, scalar reads
    # w_ref : VMEM (2, 4) f32, b/g/bt : VMEM (1, 4) f32
    # o_ref : VMEM (2*N, 8) f32
    n = x_ref.shape[0] // 2                  # static (N = 2)

    w0 = w_ref[0:1, :]                       # (1, 4)
    w1 = w_ref[1:2, :]                       # (1, 4)
    b = b_ref[...]                           # (1, 4)
    gamma = g_ref[...]                       # (1, 4)
    beta = bt_ref[...]                       # (1, 4)

    # ---- Linear(2, 4): per-row scalar x vector FMAs, statically unrolled ----
    h_rows = [x_ref[2 * i] * w0 + x_ref[2 * i + 1] * w1 + b for i in range(n)]

    # ---- BatchNorm1d (training mode: batch stats, biased variance) ----
    inv_n = 1.0 / float(n)
    mean = h_rows[0]
    for i in range(1, n):
        mean = mean + h_rows[i]
    mean = mean * inv_n                      # (1, 4)
    var = (h_rows[0] - mean) ** 2
    for i in range(1, n):
        var = var + (h_rows[i] - mean) ** 2
    var = var * inv_n                        # (1, 4)

    scale = gamma * jax.lax.rsqrt(var + EPS)  # (1, 4)  (rsqrt -> EUP slot)
    shift = beta - mean * scale               # (1, 4)
    z_rows = [h * scale + shift for h in h_rows]          # N x (1, 4)

    # ---- stack/flatten lane duplication + final batch concat, one store ----
    zz_rows = [jnp.concatenate([z, z], axis=-1) for z in z_rows]   # N x (1, 8)
    full = jnp.concatenate(zz_rows + zz_rows, axis=0)              # (2N, 8)
    o_ref[...] = full


def model_forward(x, w, b, gamma, beta):
    """x: (N, 2) f32.  Returns (2N, 1, 1, 8) f32, matching the torch module."""
    n = x.shape[0]

    # Metadata-only reshapes (no extra XLA fusions / HBM round trips).
    x_flat = x.reshape(-1)                   # (2N,)
    b2 = b.reshape(1, 4)
    g2 = gamma.reshape(1, 4)
    bt2 = beta.reshape(1, 4)

    smem = pl.BlockSpec(memory_space=pltpu.MemorySpace.SMEM)
    vmem = pl.BlockSpec(memory_space=pltpu.MemorySpace.VMEM)

    out2d = pl.pallas_call(
        model_kernel,
        out_shape=jax.ShapeDtypeStruct((2 * n, 8), jnp.float32),
        in_specs=[smem, vmem, vmem, vmem, vmem],
        out_specs=vmem,
        cost_estimate=pl.CostEstimate(
            flops=64, transcendentals=4, bytes_accessed=304),
    )(x_flat, w, b2, g2, bt2)

    # unsqueeze(1).unsqueeze(1): pure metadata reshape
    return out2d.reshape(2 * n, 1, 1, 8)


if __name__ == "__main__":
    key = jax.random.PRNGKey(0)
    kx, kw, kb = jax.random.split(key, 3)

    # Input matching the module: x = torch.randn(2, 2)
    x = jax.random.normal(kx, (2, 2), dtype=jnp.float32)

    # Deterministic parameter init (Linear: uniform(+-1/sqrt(in)); BN: ones/zeros)
    bound = 1.0 / jnp.sqrt(2.0)
    w = jax.random.uniform(kw, (2, 4), jnp.float32, -bound, bound)   # (in, out)
    b = jax.random.uniform(kb, (4,), jnp.float32, -bound, bound)
    gamma = jnp.ones((4,), jnp.float32)
    beta = jnp.zeros((4,), jnp.float32)

    out = model_forward(x, w, b, gamma, beta)
    jax.block_until_ready(out)
    assert out.shape == (4, 1, 1, 8) and out.dtype == jnp.float32
    assert bool(jnp.all(jnp.isfinite(out)))
    print("KERNEL_OK")
</pallas_src>

<mosaic_0001>
module attributes {stable_mosaic.version = 11 : i64} {
  func.func @model_kernel(%arg0: memref<4xf32, #tpu.memory_space<smem>>, %arg1: memref<2x4xf32, #tpu.memory_space<vmem>>, %arg2: memref<1x4xf32, #tpu.memory_space<vmem>>, %arg3: memref<1x4xf32, #tpu.memory_space<vmem>>, %arg4: memref<1x4xf32, #tpu.memory_space<vmem>>, %arg5: memref<4x8xf32, #tpu.memory_space<vmem>>) attributes {dimension_semantics = [], scalar_prefetch = 0 : i64, scratch_operands = 0 : i64, tpu.core_type = #tpu.core_type<tc>} {
    %c0 = arith.constant 0 : index
    %c0_0 = arith.constant 0 : index
    %0 = vector.load %arg1[%c0, %c0_0] : memref<2x4xf32, #tpu.memory_space<vmem>>, vector<1x4xf32>
    %c1 = arith.constant 1 : index
    %c0_1 = arith.constant 0 : index
    %1 = vector.load %arg1[%c1, %c0_1] : memref<2x4xf32, #tpu.memory_space<vmem>>, vector<1x4xf32>
    %c0_2 = arith.constant 0 : index
    %c0_3 = arith.constant 0 : index
    %2 = vector.load %arg2[%c0_2, %c0_3] : memref<1x4xf32, #tpu.memory_space<vmem>>, vector<1x4xf32>
    %c0_4 = arith.constant 0 : index
    %c0_5 = arith.constant 0 : index
    %3 = vector.load %arg3[%c0_4, %c0_5] : memref<1x4xf32, #tpu.memory_space<vmem>>, vector<1x4xf32>
    %c0_6 = arith.constant 0 : index
    %c0_7 = arith.constant 0 : index
    %4 = vector.load %arg4[%c0_6, %c0_7] : memref<1x4xf32, #tpu.memory_space<vmem>>, vector<1x4xf32>
    %c0_8 = arith.constant 0 : index
    %5 = memref.load %arg0[%c0_8] : memref<4xf32, #tpu.memory_space<smem>>
    %6 = vector.broadcast %5 : f32 to vector<1x4xf32>
    %7 = arith.mulf %6, %0 : vector<1x4xf32>
    %c1_9 = arith.constant 1 : index
    %8 = memref.load %arg0[%c1_9] : memref<4xf32, #tpu.memory_space<smem>>
    %9 = vector.broadcast %8 : f32 to vector<1x4xf32>
    %10 = arith.mulf %9, %1 : vector<1x4xf32>
    %11 = arith.addf %7, %10 : vector<1x4xf32>
    %12 = arith.addf %11, %2 : vector<1x4xf32>
    %c2 = arith.constant 2 : index
    %13 = memref.load %arg0[%c2] : memref<4xf32, #tpu.memory_space<smem>>
    %14 = vector.broadcast %13 : f32 to vector<1x4xf32>
    %15 = arith.mulf %14, %0 : vector<1x4xf32>
    %c3 = arith.constant 3 : index
    %16 = memref.load %arg0[%c3] : memref<4xf32, #tpu.memory_space<smem>>
    %17 = vector.broadcast %16 : f32 to vector<1x4xf32>
    %18 = arith.mulf %17, %1 : vector<1x4xf32>
    %19 = arith.addf %15, %18 : vector<1x4xf32>
    %20 = arith.addf %19, %2 : vector<1x4xf32>
    %21 = arith.addf %12, %20 : vector<1x4xf32>
    %cst = arith.constant 5.000000e-01 : f32
    %22 = vector.broadcast %cst : f32 to vector<1x4xf32>
    %23 = arith.mulf %21, %22 : vector<1x4xf32>
    %24 = arith.subf %12, %23 : vector<1x4xf32>
    %25 = arith.mulf %24, %24 : vector<1x4xf32>
    %26 = arith.subf %20, %23 : vector<1x4xf32>
    %27 = arith.mulf %26, %26 : vector<1x4xf32>
    %28 = arith.addf %25, %27 : vector<1x4xf32>
    %cst_10 = arith.constant 5.000000e-01 : f32
    %29 = vector.broadcast %cst_10 : f32 to vector<1x4xf32>
    %30 = arith.mulf %28, %29 : vector<1x4xf32>
    %cst_11 = arith.constant 9.99999974E-6 : f32
    %31 = vector.broadcast %cst_11 : f32 to vector<1x4xf32>
    %32 = arith.addf %30, %31 : vector<1x4xf32>
    %33 = math.rsqrt %32 : vector<1x4xf32>
    %34 = arith.mulf %3, %33 : vector<1x4xf32>
    %35 = arith.mulf %23, %34 : vector<1x4xf32>
    %36 = arith.subf %4, %35 : vector<1x4xf32>
    %37 = arith.mulf %12, %34 : vector<1x4xf32>
    %38 = arith.addf %37, %36 : vector<1x4xf32>
    %39 = arith.mulf %20, %34 : vector<1x4xf32>
    %40 = arith.addf %39, %36 : vector<1x4xf32>
    %41 = tpu.concatenate %38, %38 in 1 : vector<1x4xf32>, vector<1x4xf32> -> vector<1x8xf32>
    %42 = tpu.concatenate %40, %40 in 1 : vector<1x4xf32>, vector<1x4xf32> -> vector<1x8xf32>
    %43 = tpu.concatenate %41, %42, %41, %42 in 0 : vector<1x8xf32>, vector<1x8xf32>, vector<1x8xf32>, vector<1x8xf32> -> vector<4x8xf32>
    %c0_12 = arith.constant 0 : index
    %c0_13 = arith.constant 0 : index
    %44 = vector.load %arg5[%c0_12, %c0_13] : memref<4x8xf32, #tpu.memory_space<vmem>>, vector<4x8xf32>
    tpu.vector_store %arg5[%c0_12, %c0_13], %43 {strides = array<i32>} : memref<4x8xf32, #tpu.memory_space<vmem>>, vector<4x8xf32>,
    return
  }
}

</mosaic_0001>

<llo_original>
// kernel: tpu_custom_call.1
$region0: #{tpu_custom_call.1}
  #allocation0 [shape = 'u32[]', space=smem, size = 0x4, offset = 0x4, fixed_abs, tag = 'smem constant byte address 0x4 - core index']
  #allocation1 [shape = 'u32[144,128]{1,0:T(1,128)}', space=vmem, size = 0x12000, scoped, tag = 'internal scratch']
  %s0 = inlined_call_operand.hbm [shape: f32[4], index: 0, kind: input, shape index: {}]
  %s1 = inlined_call_operand.vmem [shape: f32[2,4], index: 1, kind: input, shape index: {}]
  %s2 = inlined_call_operand.vmem [shape: f32[1,4], index: 2, kind: input, shape index: {}]
  %s3 = inlined_call_operand.vmem [shape: f32[1,4], index: 3, kind: input, shape index: {}]
  %s4 = inlined_call_operand.vmem [shape: f32[1,4], index: 4, kind: input, shape index: {}]
  %s5 = inlined_call_operand.hbm [shape: f32[4,8], index: 5, kind: output, shape index: {}]
  %s6 = sld [smem:[#allocation0]]
  $region34: #{tpu_custom_call.1} parent=0
    _
  %s8 = ssub.s32 1, %s6
  %s9 = scalar_select 0, %s8, %s6
  $region1: #{tpu_custom_call.1} parent=0
    #allocation2 [shape = 'u8[512]{0}', space=smem, size = 0x200, scoped, tag = 'input window, operand 0, single buffered']
    #allocation3 [shape = 's32[1]{0}', space=sflag, size = 0x4, scoped, tag = 'scoped memory for tpu_custom_call.1']
    #allocation4 [shape = 's32[1]{0}', space=sflag, size = 0x4, scoped, tag = 'scoped memory for tpu_custom_call.1']
    #allocation5 [shape = 'u8[2048]{0}', space=vmem, size = 0x800, scoped, tag = 'output window, operand 0, single buffered']
    %10 = vsyncpa [#allocation4], 0
    %11 = vsyncpa [#allocation3], 0
    // Predicated region
    $region2: #{tpu_custom_call.1} parent=1 // pred_check
      _
    $region3: #{tpu_custom_call.1} parent=1 // pred_check_branch
      %13 = sbr.rel (0) target = $region5
    $region4: #{tpu_custom_call.1} parent=1 // pred_region
      %s15 = ssub.s32 16, 16
      %16 = vsyncadd [#allocation4], %s15
      %19 = dma.hbm_to_smem %s0, 16, [#allocation2], [#allocation4]
    $region5: #{tpu_custom_call.1} parent=1 // pred_fallthru
      _
    // Predicated region
    $region6: #{tpu_custom_call.1} parent=1 // pred_check
      _
    $region7: #{tpu_custom_call.1} parent=1 // pred_check_branch
      %21 = sbr.rel (0) target = $region9
    $region8: #{tpu_custom_call.1} parent=1 // pred_region
      _
    $region9: #{tpu_custom_call.1} parent=1 // pred_fallthru
      _
    // Predicated region
    $region10: #{tpu_custom_call.1} parent=1 // pred_check
      _
    $region11: #{tpu_custom_call.1} parent=1 // pred_check_branch
      %23 = sbr.rel (0) target = $region13
    $region12: #{tpu_custom_call.1} parent=1 // pred_region
      _
    $region13: #{tpu_custom_call.1} parent=1 // pred_fallthru
      _
    // Predicated region
    $region14: #{tpu_custom_call.1} parent=1 // pred_check
      _
    $region15: #{tpu_custom_call.1} parent=1 // pred_check_branch
      %25 = sbr.rel (0) target = $region17
    $region16: #{tpu_custom_call.1} parent=1 // pred_region
      _
    $region17: #{tpu_custom_call.1} parent=1 // pred_fallthru
      _
    // Predicated region
    $region18: #{tpu_custom_call.1} parent=1 // pred_check
      _
    $region19: #{tpu_custom_call.1} parent=1 // pred_check_branch
      %27 = sbr.rel (0) target = $region21
    $region20: #{tpu_custom_call.1} parent=1 // pred_region
      _
    $region21: #{tpu_custom_call.1} parent=1 // pred_fallthru
      _
    // Predicated region
    $region22: #{tpu_custom_call.1} parent=1 // pred_check
      _
    $region23: #{tpu_custom_call.1} parent=1 // pred_check_branch
      %29 = sbr.rel (0) target = $region25
    $region24: #{tpu_custom_call.1} parent=1 // pred_region
      %30 = dma.done [#allocation4], 16
    $region25: #{tpu_custom_call.1} parent=1 // pred_fallthru
      _
    %31 = sfence
    %v32 = vld [vmem:[%s1] sm:$0x1]
    %v33 = vld [vmem:[%s1 + $0x1] sm:$0x1]
    %v34 = vld [vmem:[%s2] sm:$0x1]
    %v35 = vld [vmem:[%s3] sm:$0x1]
    %v36 = vld [vmem:[%s4] sm:$0x1]
    %s37 = sld [smem:[#allocation2]]
    %v38 = vstv %s37
    %v39 = vmul.f32 %v38, %v32
    %s40 = sld [smem:[#allocation2 + $0x1]]
    %v41 = vstv %s40
    %v42 = vmul.f32 %v41, %v33
    %v43 = vadd.f32 %v39, %v42
    %v44 = vadd.f32 %v43, %v34
    %s45 = sld [smem:[#allocation2 + $0x2]]
    %v46 = vstv %s45
    %v47 = vmul.f32 %v46, %v32
    %s48 = sld [smem:[#allocation2 + $0x3]]
    %v49 = vstv %s48
    %v50 = vmul.f32 %v49, %v33
    %v51 = vadd.f32 %v47, %v50
    %v52 = vadd.f32 %v51, %v34
    %v53 = vadd.f32 %v44, %v52
    %v54 = vmul.f32 %v53, 0.5
    %v55 = vsub.f32 %v44, %v54
    %v56 = vmul.f32 %v55, %v55
    %v57 = vsub.f32 %v52, %v54
    %v58 = vmul.f32 %v57, %v57
    %v59 = vadd.f32 %v56, %v58
    %v60 = vmul.f32 %v59, 0.5
    %v61 = vadd.f32 %v60, 1e-05
    %v62 = vrsqrt.pop %v61
    %v63 = vmul.f32 %v35, %v62
    %v64 = vmul.f32 %v54, %v63
    %v65 = vsub.f32 %v36, %v64
    %v66 = vmul.f32 %v44, %v63
    %v67 = vadd.f32 %v66, %v65
    %v68 = vmul.f32 %v52, %v63
    %v69 = vadd.f32 %v68, %v65
    %71 = vrot.lane.b32.xlu0 %v67, 4
    %v72 = vpop.permute.xlu0 %71
    %vm74 = vcmask 31744
    %v75 = vsel %vm74, %v67, %v72
    %77 = vrot.lane.b32.xlu0 %v69, 4
    %v78 = vpop.permute.xlu0 %77
    %v80 = vsel %vm74, %v69, %v78
    %v82 = vrot.slane %v80, 7
    %v85 = vrot.slane %v75, 6
    %v87 = vrot.slane %v80, 5
    %vm89 = vcmask 1040384
    %v90 = vsel %vm89, %v75, %v82
    %vm91 = vcmask 1041408
    %v92 = vsel %vm91, %v90, %v85
    %vm93 = vcmask 1042432
    %v94 = vsel %vm93, %v92, %v87
    %vm95 = vcmask 60416
    %96 = vst.msk [vmem:[#allocation5] sm:$0xf] %vm95, %v94
    // Predicated region
    $region26: #{tpu_custom_call.1} parent=1 // pred_check
      _
    $region27: #{tpu_custom_call.1} parent=1 // pred_check_branch
      %98 = sbr.rel (0) target = $region29
    $region28: #{tpu_custom_call.1} parent=1 // pred_region
      %s100 = ssub.s32 64, 64
      %101 = vsyncadd [#allocation3], %s100
      %s103 = sshll.u32 [#allocation5], 4
      %s104 = int_to_ptr.vmem [resolvable:$true] %s103
      %106 = dma.vmem_to_hbm [thread:$0]  %s104, 64, %s5, [#allocation3]
    $region29: #{tpu_custom_call.1} parent=1 // pred_fallthru
      _
    // Predicated region
    $region30: #{tpu_custom_call.1} parent=1 // pred_check
      _
    $region31: #{tpu_custom_call.1} parent=1 // pred_check_branch
      %108 = sbr.rel (0) target = $region33
    $region32: #{tpu_custom_call.1} parent=1 // pred_region
      %109 = dma.done [#allocation3], 64
    $region33: #{tpu_custom_call.1} parent=1 // pred_fallthru
      _
    %110 = vsyncpa [#allocation3], 1
    %111 = vsyncpa [#allocation4], 1

</llo_original>
